<compile_context>
chip_gen: v7x
topology: tpu7x:2x2x1
jax: 0.10.0
libtpu: 0.0.40
codegen_flags: <defaults>
</compile_context>

<pallas_src>
import functools
import numpy as np
import jax
import jax.numpy as jnp
from jax.experimental import pallas as pl
from jax.experimental.pallas import tpu as pltpu

STUDENT_TEMP = 0.1
CENTER_MOMENTUM = 0.9


def _vmem_limit_bytes():
    """Generation-aware scoped-VMEM limit: ~48 MiB on v7x (64 MiB/TC),
    ~96 MiB on v5e/v6e (128 MiB).  Conservative fallback if the query fails."""
    cap = 64 * 1024 * 1024
    try:
        info = pltpu.get_tpu_info()
        cap = int(getattr(info, "vmem_capacity_bytes", cap) or cap)
    except Exception:
        pass
    return int(min((cap * 3) // 4, 100 * 1024 * 1024))


def _pick_row_tile(batch, dim, teacher_dtype, student_dtype, vmem_limit):
    """Largest row tile that (a) divides `batch`, (b) respects sublane packing
    of the streamed dtypes and (c) keeps the whole per-tile VMEM footprint
    (double-buffered teacher + student streams, q0/q1 scratches and the f32
    intermediates the compiler materializes) inside ~80% of the VMEM limit."""
    t_esz = np.dtype(teacher_dtype).itemsize
    s_esz = np.dtype(student_dtype).itemsize
    # per batch-row bytes: teacher (2 crops x 2 buffers) + student (x2 buffers)
    # + q0/q1 f32 scratches + ~4 f32 per-tile intermediates (s, e, logp, w*logp)
    bytes_per_row = dim * (4 * t_esz + 2 * s_esz + 2 * 4 + 4 * 4)
    budget = int(vmem_limit * 0.8)
    max_rows = max(8, budget // max(bytes_per_row, 1))
    align = 16 if min(t_esz, s_esz) < 4 else 8
    if batch <= max_rows:
        return batch                      # full-extent block: always legal
    if batch % align:
        # TODO(synk): support non-sublane-aligned batches with a cdiv grid and
        # masked tail tiles; fall back to a full-batch block for now.
        return batch
    t = max((min(max_rows, batch) // align) * align, align)
    while t >= align:
        if batch % t == 0:
            return t
        t -= align
    return align


# ----------------------------- fused kernel ----------------------------------
def _dino_fused_kernel(temp_ref, teacher_ref, center_ref, student_ref,
                       loss_part_ref, center_part_ref,
                       q0_ref, q1_ref, acc_ref):
    v = pl.program_id(1)                  # student crop (inner, serial)

    @pl.when(v == 0)
    def _():
        # Teacher work: once per batch tile, reused for every student crop.
        inv_temp = 1.0 / temp_ref[0, 0]                        # scalar (SMEM)
        center = center_ref[...]                               # (1, D) f32
        t0 = teacher_ref[0, :, :].astype(jnp.float32)          # (TB, D)
        t1 = teacher_ref[1, :, :].astype(jnp.float32)

        # partial teacher-batch sum for the center EMA (reduced in wrapper)
        center_part_ref[0, :, :] = (jnp.sum(t0, axis=0, keepdims=True)
                                    + jnp.sum(t1, axis=0, keepdims=True))

        def _rows_softmax(t):
            z = (t - center) * inv_temp
            z = z - jnp.max(z, axis=-1, keepdims=True)
            e = jnp.exp(z)
            # one reciprocal per row instead of D divisions per row
            inv_den = pl.reciprocal(jnp.sum(e, axis=-1, keepdims=True),
                                    approx=False)
            return e * inv_den

        q0_ref[...] = _rows_softmax(t0)
        q1_ref[...] = _rows_softmax(t1)
        acc_ref[...] = jnp.zeros_like(acc_ref)

    # ---- student crop v: log-softmax + weighted accumulation ----------------
    s = student_ref[...].astype(jnp.float32) * (1.0 / STUDENT_TEMP)   # (TB, D)
    m = jnp.max(s, axis=-1, keepdims=True)
    e = jnp.exp(s - m)
    lse = m + jnp.log(jnp.sum(e, axis=-1, keepdims=True))
    logp = s - lse                                                    # (TB, D)

    # crop 0 pairs only with teacher crop 1, crop 1 only with teacher crop 0,
    # crops >= 2 pair with both:  w = (v != 0) * q0 + (v != 1) * q1
    c0 = (v != 0).astype(jnp.float32)
    c1 = (v != 1).astype(jnp.float32)
    w = c0 * q0_ref[...] + c1 * q1_ref[...]

    # sublane (row) reduction only; the cross-lane sum happens in the wrapper
    acc_ref[...] += jnp.sum(w * logp, axis=0, keepdims=True)

    @pl.when(v == pl.num_programs(1) - 1)
    def _():
        loss_part_ref[0, :, :] = acc_ref[...]


# --------------------------- functional wrapper -------------------------------
def dino_loss_forward(student_output, teacher_output, center, temp, ncrops):
    """Pure functional DINO loss forward. Returns (loss_scalar, new_center)."""
    n_teacher, D = teacher_output.shape
    assert n_teacher % 2 == 0
    batch = n_teacher // 2
    assert student_output.shape == (ncrops * batch, D)
    assert ncrops >= 2

    temp = jnp.asarray(temp, jnp.float32).reshape(1, 1)
    center = jnp.asarray(center, jnp.float32).reshape(1, D)
    teacher3 = teacher_output.reshape(2, batch, D)
    student3 = student_output.reshape(ncrops, batch, D)

    vmem_limit = _vmem_limit_bytes()
    tb = _pick_row_tile(batch, D, teacher_output.dtype, student_output.dtype,
                        vmem_limit)
    nbt = batch // tb

    t_esz = np.dtype(teacher_output.dtype).itemsize
    s_esz = np.dtype(student_output.dtype).itemsize

    loss_parts, center_parts = pl.pallas_call(
        _dino_fused_kernel,
        out_shape=(
            jax.ShapeDtypeStruct((nbt, 1, D), jnp.float32),   # loss lane partials
            jax.ShapeDtypeStruct((nbt, 1, D), jnp.float32),   # teacher-sum partials
        ),
        grid=(nbt, ncrops),
        in_specs=[
            pl.BlockSpec(memory_space=pltpu.MemorySpace.SMEM),       # temp (1,1)
            pl.BlockSpec((2, tb, D), lambda j, v: (0, j, 0)),        # teacher (resident in v)
            pl.BlockSpec((1, D), lambda j, v: (0, 0)),               # center (resident)
            pl.BlockSpec((None, tb, D), lambda j, v: (v, j, 0)),     # student (streamed)
        ],
        out_specs=(
            pl.BlockSpec((1, 1, D), lambda j, v: (j, 0, 0)),
            pl.BlockSpec((1, 1, D), lambda j, v: (j, 0, 0)),
        ),
        scratch_shapes=[pltpu.VMEM((tb, D), jnp.float32),            # q0
                        pltpu.VMEM((tb, D), jnp.float32),            # q1
                        pltpu.VMEM((1, D), jnp.float32)],            # per-tile lane acc
        compiler_params=pltpu.CompilerParams(
            # batch tiles are fully independent -> megacore-shardable on v7x;
            # the crop axis accumulates into per-tile scratch -> arbitrary.
            dimension_semantics=("parallel", "arbitrary"),
            vmem_limit_bytes=vmem_limit),
        cost_estimate=pl.CostEstimate(
            flops=int((8 * 2 * batch + 10 * ncrops * batch) * D),
            transcendentals=int((2 * batch + ncrops * batch) * D),
            bytes_accessed=int(2 * batch * D * t_esz
                               + ncrops * batch * D * s_esz
                               + (2 * nbt + 1) * D * 4)),
    )(temp, teacher3, center, student3)

    n_terms = 2 * (ncrops - 1)
    loss = -jnp.sum(loss_parts) / (batch * n_terms)
    batch_center = jnp.sum(center_parts, axis=0) / n_teacher              # (1, D)
    new_center = center * CENTER_MOMENTUM + batch_center * (1.0 - CENTER_MOMENTUM)
    return loss, new_center


class DINOLossPallas:
    """JAX/Pallas port of the PyTorch DINOLoss module (forward pass)."""

    def __init__(self, out_dim, ncrops, warmup_teacher_temp, teacher_temp,
                 warmup_teacher_temp_epochs, nepochs,
                 student_temp=0.1, center_momentum=0.9):
        assert student_temp == STUDENT_TEMP and center_momentum == CENTER_MOMENTUM
        self.out_dim = out_dim
        self.ncrops = ncrops
        self.center = jnp.zeros((1, out_dim), jnp.float32)       # buffer, zero-init
        self.teacher_temp_schedule = np.concatenate((
            np.linspace(warmup_teacher_temp, teacher_temp, warmup_teacher_temp_epochs),
            np.ones(nepochs - warmup_teacher_temp_epochs) * teacher_temp,
        )).astype(np.float32)

    def __call__(self, student_output, teacher_output, epoch):
        temp = self.teacher_temp_schedule[epoch]
        loss, new_center = dino_loss_forward(student_output, teacher_output,
                                             self.center, temp, self.ncrops)
        # Host-side stateful buffer update (mirrors PyTorch).  Inside jitted
        # training code, call `dino_loss_forward` and thread `center` explicitly.
        self.center = new_center
        return loss


# ------------------------- pure-JAX reference -------------------------
def _dino_loss_ref(student, teacher, center, temp, ncrops):
    s_chunks = jnp.split(student / STUDENT_TEMP, ncrops, axis=0)
    q = jax.nn.softmax((teacher - center) / temp, axis=-1)
    t_chunks = jnp.split(q, 2, axis=0)
    total, n = 0.0, 0
    for iq, qq in enumerate(t_chunks):
        for v in range(ncrops):
            if v == iq:
                continue
            loss = jnp.sum(-qq * jax.nn.log_softmax(s_chunks[v], axis=-1), axis=-1)
            total = total + loss.mean()
            n += 1
    total = total / n
    new_center = (center * CENTER_MOMENTUM
                  + teacher.mean(axis=0, keepdims=True) * (1.0 - CENTER_MOMENTUM))
    return total, new_center


if __name__ == "__main__":
    # small, module-consistent shapes
    OUT_DIM = 128
    NCROPS = 4
    BATCH = 8
    EPOCH = 1

    key = jax.random.PRNGKey(0)
    k1, k2 = jax.random.split(key)
    student = jax.random.normal(k1, (NCROPS * BATCH, OUT_DIM), jnp.float32)
    teacher = jax.random.normal(k2, (2 * BATCH, OUT_DIM), jnp.float32)

    mod = DINOLossPallas(out_dim=OUT_DIM, ncrops=NCROPS,
                         warmup_teacher_temp=0.04, teacher_temp=0.07,
                         warmup_teacher_temp_epochs=3, nepochs=10)

    center_before = mod.center
    loss = mod(student, teacher, EPOCH)
    loss = jax.block_until_ready(loss)
    new_center = jax.block_until_ready(mod.center)

    # sanity check against a pure-JAX reference (f32 path, strict tolerance)
    temp = jnp.asarray(mod.teacher_temp_schedule[EPOCH], jnp.float32)
    ref_loss, ref_center = _dino_loss_ref(student, teacher, center_before,
                                          temp, NCROPS)
    np.testing.assert_allclose(np.asarray(loss), np.asarray(ref_loss),
                               rtol=1e-5, atol=1e-5)
    np.testing.assert_allclose(np.asarray(new_center), np.asarray(ref_center),
                               rtol=1e-5, atol=2e-6)

    # bf16 input path (halves HBM traffic of the dominant streams); the kernel
    # upcasts right after load, accumulation stays in f32.
    loss_bf16, center_bf16 = dino_loss_forward(student.astype(jnp.bfloat16),
                                               teacher.astype(jnp.bfloat16),
                                               center_before, temp, NCROPS)
    loss_bf16 = jax.block_until_ready(loss_bf16)
    assert np.isfinite(np.asarray(loss_bf16)).all()
    assert np.isfinite(np.asarray(center_bf16)).all()
    np.testing.assert_allclose(np.asarray(loss_bf16), np.asarray(ref_loss),
                               rtol=5e-2, atol=5e-2)

    print("KERNEL_OK")
</pallas_src>

<mosaic_0001>
module attributes {stable_mosaic.version = 11 : i64} {
  func.func @_dino_fused_kernel(%arg0: i32, %arg1: i32, %arg2: memref<1x1xf32, #tpu.memory_space<smem>>, %arg3: memref<2x8x128xf32, #tpu.memory_space<vmem>>, %arg4: memref<1x128xf32, #tpu.memory_space<vmem>>, %arg5: memref<1x8x128xf32, #tpu.memory_space<vmem>>, %arg6: memref<1x1x128xf32, #tpu.memory_space<vmem>>, %arg7: memref<1x1x128xf32, #tpu.memory_space<vmem>>, %arg8: memref<8x128xf32, #tpu.memory_space<vmem>>, %arg9: memref<8x128xf32, #tpu.memory_space<vmem>>, %arg10: memref<1x128xf32, #tpu.memory_space<vmem>>) attributes {dimension_semantics = [#tpu.dimension_semantics<parallel>, #tpu.dimension_semantics<arbitrary>], iteration_bounds = array<i64: 1, 4>, scalar_prefetch = 0 : i64, scratch_operands = 3 : i64, tpu.core_type = #tpu.core_type<tc>, window_params = [{transform_indices = @transform_0, window_bounds = array<i64: 1, 1>}, {transform_indices = @transform_1, window_bounds = array<i64: 2, 8, 128>}, {pipeline_mode = #tpu.pipeline_mode<synchronous>, transform_indices = @transform_2, window_bounds = array<i64: 1, 128>}, {transform_indices = @transform_3, window_bounds = array<i64: 1, 8, 128>}, {transform_indices = @transform_4, window_bounds = array<i64: 1, 1, 128>}, {transform_indices = @transform_5, window_bounds = array<i64: 1, 1, 128>}]} {
    %c0_i32 = arith.constant 0 : i32
    %0 = arith.cmpi eq, %arg1, %c0_i32 : i32
    %1 = arith.extui %0 : i1 to i32
    %c0_i32_0 = arith.constant 0 : i32
    %2 = arith.cmpi ne, %1, %c0_i32_0 : i32
    scf.if %2 {
      %c0_16 = arith.constant 0 : index
      %c0_17 = arith.constant 0 : index
      %40 = memref.load %arg2[%c0_16, %c0_17] : memref<1x1xf32, #tpu.memory_space<smem>>
      %cst_18 = arith.constant 1.000000e+00 : f32
      %41 = arith.divf %cst_18, %40 : f32
      %c0_19 = arith.constant 0 : index
      %c0_20 = arith.constant 0 : index
      %42 = vector.load %arg4[%c0_19, %c0_20] : memref<1x128xf32, #tpu.memory_space<vmem>>, vector<1x128xf32>
      %c0_21 = arith.constant 0 : index
      %c0_22 = arith.constant 0 : index
      %c0_23 = arith.constant 0 : index
      %43 = vector.load %arg3[%c0_21, %c0_22, %c0_23] : memref<2x8x128xf32, #tpu.memory_space<vmem>>, vector<1x8x128xf32>
      %44 = vector.shape_cast %43 : vector<1x8x128xf32> to vector<8x128xf32>
      %c1 = arith.constant 1 : index
      %c0_24 = arith.constant 0 : index
      %c0_25 = arith.constant 0 : index
      %45 = vector.load %arg3[%c1, %c0_24, %c0_25] : memref<2x8x128xf32, #tpu.memory_space<vmem>>, vector<1x8x128xf32>
      %46 = vector.shape_cast %45 : vector<1x8x128xf32> to vector<8x128xf32>
      %cst_26 = arith.constant dense<0.000000e+00> : vector<128xf32>
      %47 = vector.multi_reduction <add>, %44, %cst_26 [0] : vector<8x128xf32> to vector<128xf32>
      %48 = vector.shape_cast %47 : vector<128xf32> to vector<1x128xf32>
      %cst_27 = arith.constant dense<0.000000e+00> : vector<128xf32>
      %49 = vector.multi_reduction <add>, %46, %cst_27 [0] : vector<8x128xf32> to vector<128xf32>
      %50 = vector.shape_cast %49 : vector<128xf32> to vector<1x128xf32>
      %51 = arith.addf %48, %50 : vector<1x128xf32>
      %c0_28 = arith.constant 0 : index
      %c0_29 = arith.constant 0 : index
      %c0_30 = arith.constant 0 : index
      %52 = vector.load %arg7[%c0_28, %c0_29, %c0_30] : memref<1x1x128xf32, #tpu.memory_space<vmem>>, vector<1x1x128xf32>
      %53 = vector.shape_cast %52 : vector<1x1x128xf32> to vector<1x128xf32>
      %54 = vector.shape_cast %51 : vector<1x128xf32> to vector<1x1x128xf32>
      tpu.vector_store %arg7[%c0_28, %c0_29, %c0_30], %54 {strides = array<i32>} : memref<1x1x128xf32, #tpu.memory_space<vmem>>, vector<1x1x128xf32>,
      %55 = vector.broadcast %42 : vector<1x128xf32> to vector<8x128xf32>
      %56 = arith.subf %44, %55 : vector<8x128xf32>
      %57 = vector.broadcast %41 : f32 to vector<8x128xf32>
      %58 = arith.mulf %56, %57 : vector<8x128xf32>
      %cst_31 = arith.constant dense<0xFF800000> : vector<8xf32>
      %59 = vector.multi_reduction <maximumf>, %58, %cst_31 [1] : vector<8x128xf32> to vector<8xf32>
      %60 = vector.shape_cast %59 : vector<8xf32> to vector<8x1xf32>
      %61 = vector.broadcast %60 : vector<8x1xf32> to vector<8x128xf32>
      %62 = arith.subf %58, %61 : vector<8x128xf32>
      %63 = math.exp %62 : vector<8x128xf32>
      %cst_32 = arith.constant dense<0.000000e+00> : vector<8xf32>
      %64 = vector.multi_reduction <add>, %63, %cst_32 [1] : vector<8x128xf32> to vector<8xf32>
      %65 = vector.shape_cast %64 : vector<8xf32> to vector<8x1xf32>
      %66 = tpu.reciprocal %65 : vector<8x1xf32> -> vector<8x1xf32>
      %67 = vector.broadcast %66 : vector<8x1xf32> to vector<8x128xf32>
      %68 = arith.mulf %63, %67 : vector<8x128xf32>
      %c0_33 = arith.constant 0 : index
      %c0_34 = arith.constant 0 : index
      %69 = vector.load %arg8[%c0_33, %c0_34] : memref<8x128xf32, #tpu.memory_space<vmem>>, vector<8x128xf32>
      tpu.vector_store %arg8[%c0_33, %c0_34], %68 {strides = array<i32>} : memref<8x128xf32, #tpu.memory_space<vmem>>, vector<8x128xf32>,
      %70 = vector.broadcast %42 : vector<1x128xf32> to vector<8x128xf32>
      %71 = arith.subf %46, %70 : vector<8x128xf32>
      %72 = vector.broadcast %41 : f32 to vector<8x128xf32>
      %73 = arith.mulf %71, %72 : vector<8x128xf32>
      %cst_35 = arith.constant dense<0xFF800000> : vector<8xf32>
      %74 = vector.multi_reduction <maximumf>, %73, %cst_35 [1] : vector<8x128xf32> to vector<8xf32>
      %75 = vector.shape_cast %74 : vector<8xf32> to vector<8x1xf32>
      %76 = vector.broadcast %75 : vector<8x1xf32> to vector<8x128xf32>
      %77 = arith.subf %73, %76 : vector<8x128xf32>
      %78 = math.exp %77 : vector<8x128xf32>
      %cst_36 = arith.constant dense<0.000000e+00> : vector<8xf32>
      %79 = vector.multi_reduction <add>, %78, %cst_36 [1] : vector<8x128xf32> to vector<8xf32>
      %80 = vector.shape_cast %79 : vector<8xf32> to vector<8x1xf32>
      %81 = tpu.reciprocal %80 : vector<8x1xf32> -> vector<8x1xf32>
      %82 = vector.broadcast %81 : vector<8x1xf32> to vector<8x128xf32>
      %83 = arith.mulf %78, %82 : vector<8x128xf32>
      %c0_37 = arith.constant 0 : index
      %c0_38 = arith.constant 0 : index
      %84 = vector.load %arg9[%c0_37, %c0_38] : memref<8x128xf32, #tpu.memory_space<vmem>>, vector<8x128xf32>
      tpu.vector_store %arg9[%c0_37, %c0_38], %83 {strides = array<i32>} : memref<8x128xf32, #tpu.memory_space<vmem>>, vector<8x128xf32>,
      %cst_39 = arith.constant 0.000000e+00 : f32
      %85 = vector.broadcast %cst_39 : f32 to vector<1x128xf32>
      %c0_40 = arith.constant 0 : index
      %c0_41 = arith.constant 0 : index
      %86 = vector.load %arg10[%c0_40, %c0_41] : memref<1x128xf32, #tpu.memory_space<vmem>>, vector<1x128xf32>
      tpu.vector_store %arg10[%c0_40, %c0_41], %85 {strides = array<i32>} : memref<1x128xf32, #tpu.memory_space<vmem>>, vector<1x128xf32>,
    } else {
    }
    %c0 = arith.constant 0 : index
    %c0_1 = arith.constant 0 : index
    %c0_2 = arith.constant 0 : index
    %3 = vector.load %arg5[%c0, %c0_1, %c0_2] : memref<1x8x128xf32, #tpu.memory_space<vmem>>, vector<1x8x128xf32>
    %4 = vector.shape_cast %3 : vector<1x8x128xf32> to vector<8x128xf32>
    %cst = arith.constant 1.000000e+01 : f32
    %5 = vector.broadcast %cst : f32 to vector<8x128xf32>
    %6 = arith.mulf %4, %5 : vector<8x128xf32>
    %cst_3 = arith.constant dense<0xFF800000> : vector<8xf32>
    %7 = vector.multi_reduction <maximumf>, %6, %cst_3 [1] : vector<8x128xf32> to vector<8xf32>
    %8 = vector.shape_cast %7 : vector<8xf32> to vector<8x1xf32>
    %9 = vector.broadcast %8 : vector<8x1xf32> to vector<8x128xf32>
    %10 = arith.subf %6, %9 : vector<8x128xf32>
    %11 = math.exp %10 : vector<8x128xf32>
    %cst_4 = arith.constant dense<0.000000e+00> : vector<8xf32>
    %12 = vector.multi_reduction <add>, %11, %cst_4 [1] : vector<8x128xf32> to vector<8xf32>
    %13 = vector.shape_cast %12 : vector<8xf32> to vector<8x1xf32>
    %14 = math.log %13 : vector<8x1xf32>
    %15 = arith.addf %8, %14 : vector<8x1xf32>
    %16 = vector.broadcast %15 : vector<8x1xf32> to vector<8x128xf32>
    %17 = arith.subf %6, %16 : vector<8x128xf32>
    %c0_i32_5 = arith.constant 0 : i32
    %18 = arith.cmpi ne, %arg1, %c0_i32_5 : i32
    %19 = arith.extui %18 : i1 to i32
    %20 = arith.sitofp %19 : i32 to f32
    %c1_i32 = arith.constant 1 : i32
    %21 = arith.cmpi ne, %arg1, %c1_i32 : i32
    %22 = arith.extui %21 : i1 to i32
    %23 = arith.sitofp %22 : i32 to f32
    %c0_6 = arith.constant 0 : index
    %c0_7 = arith.constant 0 : index
    %24 = vector.load %arg8[%c0_6, %c0_7] : memref<8x128xf32, #tpu.memory_space<vmem>>, vector<8x128xf32>
    %25 = vector.broadcast %20 : f32 to vector<8x128xf32>
    %26 = arith.mulf %25, %24 : vector<8x128xf32>
    %c0_8 = arith.constant 0 : index
    %c0_9 = arith.constant 0 : index
    %27 = vector.load %arg9[%c0_8, %c0_9] : memref<8x128xf32, #tpu.memory_space<vmem>>, vector<8x128xf32>
    %28 = vector.broadcast %23 : f32 to vector<8x128xf32>
    %29 = arith.mulf %28, %27 : vector<8x128xf32>
    %30 = arith.addf %26, %29 : vector<8x128xf32>
    %c0_10 = arith.constant 0 : index
    %c0_11 = arith.constant 0 : index
    %31 = vector.load %arg10[%c0_10, %c0_11] : memref<1x128xf32, #tpu.memory_space<vmem>>, vector<1x128xf32>
    %32 = arith.mulf %30, %17 : vector<8x128xf32>
    %cst_12 = arith.constant dense<0.000000e+00> : vector<128xf32>
    %33 = vector.multi_reduction <add>, %32, %cst_12 [0] : vector<8x128xf32> to vector<128xf32>
    %34 = vector.shape_cast %33 : vector<128xf32> to vector<1x128xf32>
    %35 = arith.addf %31, %34 : vector<1x128xf32>
    %c0_13 = arith.constant 0 : index
    %c0_14 = arith.constant 0 : index
    %36 = vector.load %arg10[%c0_13, %c0_14] : memref<1x128xf32, #tpu.memory_space<vmem>>, vector<1x128xf32>
    tpu.vector_store %arg10[%c0_13, %c0_14], %35 {strides = array<i32>} : memref<1x128xf32, #tpu.memory_space<vmem>>, vector<1x128xf32>,
    %c3_i32 = arith.constant 3 : i32
    %37 = arith.cmpi eq, %arg1, %c3_i32 : i32
    %38 = arith.extui %37 : i1 to i32
    %c0_i32_15 = arith.constant 0 : i32
    %39 = arith.cmpi ne, %38, %c0_i32_15 : i32
    scf.if %39 {
      %c0_16 = arith.constant 0 : index
      %c0_17 = arith.constant 0 : index
      %40 = vector.load %arg10[%c0_16, %c0_17] : memref<1x128xf32, #tpu.memory_space<vmem>>, vector<1x128xf32>
      %c0_18 = arith.constant 0 : index
      %c0_19 = arith.constant 0 : index
      %c0_20 = arith.constant 0 : index
      %41 = vector.load %arg6[%c0_18, %c0_19, %c0_20] : memref<1x1x128xf32, #tpu.memory_space<vmem>>, vector<1x1x128xf32>
      %42 = vector.shape_cast %41 : vector<1x1x128xf32> to vector<1x128xf32>
      %43 = vector.shape_cast %40 : vector<1x128xf32> to vector<1x1x128xf32>
      tpu.vector_store %arg6[%c0_18, %c0_19, %c0_20], %43 {strides = array<i32>} : memref<1x1x128xf32, #tpu.memory_space<vmem>>, vector<1x1x128xf32>,
    } else {
    }
    return
  }
  func.func @transform_0(%arg0: i32, %arg1: i32) -> (i32, i32) {
    %c0_i32 = arith.constant 0 : i32
    %c0_i32_0 = arith.constant 0 : i32
    %c0_i32_1 = arith.constant 0 : i32
    return %c0_i32, %c0_i32_0 : i32, i32
  }
  func.func @transform_1(%arg0: i32, %arg1: i32) -> (i32, i32, i32) {
    %c0_i32 = arith.constant 0 : i32
    %c0_i32_0 = arith.constant 0 : i32
    %c0_i32_1 = arith.constant 0 : i32
    return %c0_i32, %arg0, %c0_i32_0 : i32, i32, i32
  }
  func.func @transform_2(%arg0: i32, %arg1: i32) -> (i32, i32) {
    %c0_i32 = arith.constant 0 : i32
    %c0_i32_0 = arith.constant 0 : i32
    %c0_i32_1 = arith.constant 0 : i32
    return %c0_i32, %c0_i32_0 : i32, i32
  }
  func.func @transform_3(%arg0: i32, %arg1: i32) -> (i32, i32, i32) {
    %c0_i32 = arith.constant 0 : i32
    %c0_i32_0 = arith.constant 0 : i32
    return %arg1, %arg0, %c0_i32 : i32, i32, i32
  }
  func.func @transform_4(%arg0: i32, %arg1: i32) -> (i32, i32, i32) {
    %c0_i32 = arith.constant 0 : i32
    %c0_i32_0 = arith.constant 0 : i32
    %c0_i32_1 = arith.constant 0 : i32
    return %arg0, %c0_i32, %c0_i32_0 : i32, i32, i32
  }
  func.func @transform_5(%arg0: i32, %arg1: i32) -> (i32, i32, i32) {
    %c0_i32 = arith.constant 0 : i32
    %c0_i32_0 = arith.constant 0 : i32
    %c0_i32_1 = arith.constant 0 : i32
    return %arg0, %c0_i32, %c0_i32_0 : i32, i32, i32
  }
}

</mosaic_0001>

<llo_original>
// kernel: tpu_custom_call.1
$region0: #{tpu_custom_call.1}
  #allocation0 [shape = 'u32[]', space=smem, size = 0x4, offset = 0x4, fixed_abs, tag = 'smem constant byte address 0x4 - core index']
  #allocation1 [shape = 'u32[144,128]{1,0:T(1,128)}', space=vmem, size = 0x12000, scoped, tag = 'internal scratch']
  #allocation2 [shape = 'f32[8,128]{1,0:T(8,128)}', space=vmem, size = 0x1000, scoped, tag = 'scratch operand']
  #allocation3 [shape = 'f32[8,128]{1,0:T(8,128)}', space=vmem, size = 0x1000, scoped, tag = 'scratch operand']
  #allocation4 [shape = 'f32[1,128]{1,0:T(1,128)}', space=vmem, size = 0x200, scoped, tag = 'scratch operand']
  #allocation5 [shape = 'f32[1,1]{1,0:T(1,128)S(6)}', space=smem, size = 0x200, scoped, tag = 'scoped memory for tpu_custom_call.1']
  %s0 = inlined_call_operand.<no memory space> [shape: f32[1,1], index: 0, kind: input, shape index: {}]
  %s1 = inlined_call_operand.hbm [shape: f32[2,8,128], index: 1, kind: input, shape index: {}]
  %s2 = inlined_call_operand.vmem [shape: f32[1,128], index: 2, kind: input, shape index: {}]
  %s3 = inlined_call_operand.hbm [shape: f32[4,8,128], index: 3, kind: input, shape index: {}]
  %s4 = inlined_call_operand.hbm [shape: f32[1,1,128], index: 4, kind: output, shape index: {0}]
  %s5 = inlined_call_operand.hbm [shape: f32[1,1,128], index: 5, kind: output, shape index: {1}]
  %6 = xla_tuple %s4, %s5
  %s7 = sld [smem:[#allocation0]]
  $region73: #{tpu_custom_call.1} parent=0
    _
  %s9 = ssub.s32 1, %s7
  %s10 = scalar_select 0, %s9, %s7
  %11 = sst [smem:[#allocation5]] %s0
  $region1: #{tpu_custom_call.1} parent=0
    #allocation6 [shape = 'u8[8192]{0}', space=vmem, size = 0x2000, scoped, tag = 'input window, operand 1, single buffered']
    #allocation7 [shape = 's32[2]{0}', space=sflag, size = 0x8, scoped, tag = 'scoped memory for tpu_custom_call.1']
    #allocation8 [shape = 's32[2]{0}', space=sflag, size = 0x8, scoped, tag = 'scoped memory for tpu_custom_call.1']
    #allocation9 [shape = 'u8[8192]{0}', space=vmem, size = 0x2000, scoped, tag = 'input window, operand 3']
    #allocation10 [shape = 's32[2]{0}', space=sflag, size = 0x8, scoped, tag = 'scoped memory for tpu_custom_call.1']
    #allocation11 [shape = 'u8[512]{0}', space=vmem, size = 0x400, scoped, tag = 'output window, operand 0, single buffered']
    #allocation12 [shape = 'u8[512]{0}', space=vmem, size = 0x400, scoped, tag = 'output window, operand 1, single buffered']
    #allocation13 [shape = 's32[1]{0}', space=sflag, size = 0x4, scoped, tag = 'scoped memory for tpu_custom_call.1']
    %12 = vsyncpa [#allocation7], 0
    %13 = vsyncpa [#allocation10], 0
    %s14 = scalar_lea.sflag [#allocation10], 1
    %15 = vsyncpa %s14, 0
    %16 = vsyncpa [#allocation8], 0
    %17 = vsyncpa [#allocation13], 0
    loop: start=0, step=1, limit=6
    $region2: #{tpu_custom_call.1} parent=1 // loop_pre_header
      _
    $region3: #{tpu_custom_call.1} parent=1 // loop_header
      %s19 = sphi 0, %s23
      %p20 = scmp.ge.s32.totalorder %s19, 6
      %s26 = sphi 0, %s38
      %s27 = sphi 0, %s34
      %s28 = sphi 0, %s26
      %s29 = sphi 0, %s27
      %s30 = sphi 0, %s28
      %s31 = sphi 0, %s29
      %s39 = sphi 0, %s39
      %s41 = sphi 0, %s39
      %s42 = sphi 0, %s41
      %s56 = sphi 0, %s42
      %s62 = sphi 0, %s64
      %s65 = sphi 0, %s62
      %s66 = sphi 0, %s65
      %s82 = sphi 0, %s66
      %s86 = sphi 0, %s86
      %s88 = sphi 0, %s86
      %s89 = sphi 0, %s88
      %s103 = sphi 0, %s89
      %s111 = sphi 0, %s113
      %s114 = sphi 0, %s111
      %s115 = sphi 0, %s114
      %s131 = sphi 0, %s115
      %s137 = sphi 0, %s139
      %s140 = sphi 0, %s137
      %s141 = sphi 0, %s140
      %s157 = sphi 0, %s141
      %s163 = sphi 0, %s165
      %s166 = sphi 0, %s163
      %s167 = sphi 0, %s166
      %s183 = sphi 0, %s167
    $region4: #{tpu_custom_call.1} parent=1 // loop_header_branch
      %22 = sbr.rel (%p20) target = $region8
    $region5: #{tpu_custom_call.1} parent=1 // loop_body
      %s24 = ssub.s32 %s19, 1
      %s25 = ssub.s32 %s19, 2
      %s32 = sadd.s32 1, %s27
      %p33 = scmp.ge.s32.totalorder %s32, 4
      %s34 = scalar_select %p33, 0, %s32
      %s35 = sadd.s32 1, %s26
      %s36 = scalar_select %p33, %s35, %s26
      %p37 = scmp.ge.s32.totalorder %s36, 1
      %s38 = scalar_select %p37, 0, %s36
      %s40 = sadd.s32 %s39, 1
      %p43 = scmp.eq.s32.totalorder %s19, 3
      %p44 = scmp.ne.s32.totalorder %s39, %s41
      %p45 = scmp.eq.s32.totalorder %s19, 0
      %p46 = por %p44, %p45
      %p47 = scmp.ne.s32.totalorder %s39, %s41
      %p48 = scmp.eq.s32.totalorder %s24, 3
      %p49 = por %p47, %p48
      %p50 = scmp.ne.s32.totalorder %s41, %s42
      %p51 = scmp.eq.s32.totalorder %s24, 0
      %p52 = por %p50, %p51
      %p53 = scmp.ne.s32.totalorder %s41, %s42
      %p54 = scmp.eq.s32.totalorder %s25, 3
      %p55 = por %p53, %p54
      %p57 = scmp.ne.s32.totalorder %s42, %s56
      %p58 = scmp.eq.s32.totalorder %s25, 0
      %p59 = por %p57, %p58
      %s60 = ssub.s32 %s26, %s38
      %p61 = scmp.eq.s32.totalorder %s60, 0
      %s63 = sadd.s32 %s62, 1
      %s64 = scalar_select %p61, %s62, %s63
      %p67 = pneg %p61
      %p68 = scmp.eq.s32.totalorder %s19, 3
      %p69 = por %p67, %p68
      %p70 = scmp.ne.s32.totalorder %s62, %s65
      %p71 = scmp.eq.s32.totalorder %s19, 0
      %p72 = por %p70, %p71
      %p73 = scmp.ne.s32.totalorder %s62, %s65
      %p74 = scmp.eq.s32.totalorder %s24, 3
      %p75 = por %p73, %p74
      %p76 = scmp.ne.s32.totalorder %s65, %s66
      %p77 = scmp.eq.s32.totalorder %s24, 0
      %p78 = por %p76, %p77
      %p79 = scmp.ne.s32.totalorder %s65, %s66
      %p80 = scmp.eq.s32.totalorder %s25, 3
      %p81 = por %p79, %p80
      %p83 = scmp.ne.s32.totalorder %s66, %s82
      %p84 = scmp.eq.s32.totalorder %s25, 0
      %p85 = por %p83, %p84
      %s87 = sadd.s32 %s86, 1
      %p90 = scmp.eq.s32.totalorder %s19, 3
      %p91 = scmp.ne.s32.totalorder %s86, %s88
      %p92 = scmp.eq.s32.totalorder %s19, 0
      %p93 = por %p91, %p92
      %p94 = scmp.ne.s32.totalorder %s86, %s88
      %p95 = scmp.eq.s32.totalorder %s24, 3
      %p96 = por %p94, %p95
      %p97 = scmp.ne.s32.totalorder %s88, %s89
      %p98 = scmp.eq.s32.totalorder %s24, 0
      %p99 = por %p97, %p98
      %p100 = scmp.ne.s32.totalorder %s88, %s89
      %p101 = scmp.eq.s32.totalorder %s25, 3
      %p102 = por %p100, %p101
      %p104 = scmp.ne.s32.totalorder %s89, %s103
      %p105 = scmp.eq.s32.totalorder %s25, 0
      %p106 = por %p104, %p105
      %s107 = ssub.s32 %s27, %s34
      %s108 = ssub.s32 %s26, %s38
      %s109 = sor.u32 %s107, %s108
      %p110 = scmp.eq.s32.totalorder %s109, 0
      %s112 = sadd.s32 %s111, 1
      %s113 = scalar_select %p110, %s111, %s112
      %p116 = pneg %p110
      %p117 = scmp.eq.s32.totalorder %s19, 3
      %p118 = por %p116, %p117
      %p119 = scmp.ne.s32.totalorder %s111, %s114
      %p120 = scmp.eq.s32.totalorder %s19, 0
      %p121 = por %p119, %p120
      %p122 = scmp.ne.s32.totalorder %s111, %s114
      %p123 = scmp.eq.s32.totalorder %s24, 3
      %p124 = por %p122, %p123
      %p125 = scmp.ne.s32.totalorder %s114, %s115
      %p126 = scmp.eq.s32.totalorder %s24, 0
      %p127 = por %p125, %p126
      %p128 = scmp.ne.s32.totalorder %s114, %s115
      %p129 = scmp.eq.s32.totalorder %s25, 3
      %p130 = por %p128, %p129
      %p132 = scmp.ne.s32.totalorder %s115, %s131
      %p133 = scmp.eq.s32.totalorder %s25, 0
      %p134 = por %p132, %p133
      %s135 = ssub.s32 %s26, %s38
      %p136 = scmp.eq.s32.totalorder %s135, 0
      %s138 = sadd.s32 %s137, 1
      %s139 = scalar_select %p136, %s137, %s138
      %p142 = pneg %p136
      %p143 = scmp.eq.s32.totalorder %s19, 3
      %p144 = por %p142, %p143
      %p145 = scmp.ne.s32.totalorder %s137, %s140
      %p146 = scmp.eq.s32.totalorder %s19, 0
      %p147 = por %p145, %p146
      %p148 = scmp.ne.s32.totalorder %s137, %s140
      %p149 = scmp.eq.s32.totalorder %s24, 3
      %p150 = por %p148, %p149
      %p151 = scmp.ne.s32.totalorder %s140, %s141
      %p152 = scmp.eq.s32.totalorder %s24, 0
      %p153 = por %p151, %p152
      %p154 = scmp.ne.s32.totalorder %s140, %s141
      %p155 = scmp.eq.s32.totalorder %s25, 3
      %p156 = por %p154, %p155
      %p158 = scmp.ne.s32.totalorder %s141, %s157
      %p159 = scmp.eq.s32.totalorder %s25, 0
      %p160 = por %p158, %p159
      %s161 = ssub.s32 %s26, %s38
      %p162 = scmp.eq.s32.totalorder %s161, 0
      %s164 = sadd.s32 %s163, 1
      %s165 = scalar_select %p162, %s163, %s164
      %p168 = pneg %p162
      %p169 = scmp.eq.s32.totalorder %s19, 3
      %p170 = por %p168, %p169
      %p171 = scmp.ne.s32.totalorder %s163, %s166
      %p172 = scmp.eq.s32.totalorder %s19, 0
      %p173 = por %p171, %p172
      %p174 = scmp.ne.s32.totalorder %s163, %s166
      %p175 = scmp.eq.s32.totalorder %s24, 3
      %p176 = por %p174, %p175
      %p177 = scmp.ne.s32.totalorder %s166, %s167
      %p178 = scmp.eq.s32.totalorder %s24, 0
      %p179 = por %p177, %p178
      %p180 = scmp.ne.s32.totalorder %s166, %s167
      %p181 = scmp.eq.s32.totalorder %s25, 3
      %p182 = por %p180, %p181
      %p184 = scmp.ne.s32.totalorder %s167, %s183
      %p185 = scmp.eq.s32.totalorder %s25, 0
      %p186 = por %p184, %p185
      %p187 = scmp.le.s32.totalorder 1, %s19
      %p188 = scmp.lt.s32.totalorder %s19, 5
      %p189 = pnand %p187, %p188
      %p190 = pneg %p189
      // Predicated region
      $region9: #{tpu_custom_call.1} parent=5 // pred_check
        _
      $region10: #{tpu_custom_call.1} parent=5 // pred_check_branch
        %192 = sbr.rel (%p189) target = $region12
      $region11: #{tpu_custom_call.1} parent=5 // pred_region
        %s193 = ssub.s32 %s19, 1
        // Predicated region
        $region13: #{tpu_custom_call.1} parent=11 // pred_check
          %p194 = pneg %p52
        $region14: #{tpu_custom_call.1} parent=11 // pred_check_branch
          %196 = sbr.rel (%p194) target = $region16
        $region15: #{tpu_custom_call.1} parent=11 // pred_region
          _
        $region16: #{tpu_custom_call.1} parent=11 // pred_fallthru
          _
        // Predicated region
        $region17: #{tpu_custom_call.1} parent=11 // pred_check
          %p197 = pneg %p78
        $region18: #{tpu_custom_call.1} parent=11 // pred_check_branch
          %199 = sbr.rel (%p197) target = $region20
        $region19: #{tpu_custom_call.1} parent=11 // pred_region
          %s201 = ssub.s32 256, 256
          %202 = vsyncadd [#allocation7], %s201
          %s203 = smul.addr %s28, 128
          %s204 = scalar_lea.hbm %s1, %s203
          %s205 = sshll.u32 [#allocation6], 4
          %s206 = int_to_ptr.vmem [resolvable:$true] %s205
          %211 = dma.hbm_to_vmem [thread:$0]  %s204, 256, %s206, [#allocation7], 128, 128, 8
        $region20: #{tpu_custom_call.1} parent=11 // pred_fallthru
          _
        // Predicated region
        $region21: #{tpu_custom_call.1} parent=11 // pred_check
          %p212 = pneg %p99
        $region22: #{tpu_custom_call.1} parent=11 // pred_check_branch
          %214 = sbr.rel (%p212) target = $region24
        $region23: #{tpu_custom_call.1} parent=11 // pred_region
          _
        $region24: #{tpu_custom_call.1} parent=11 // pred_fallthru
          _
      $region12: #{tpu_custom_call.1} parent=5 // pred_fallthru
        _
      %p215 = scmp.lt.s32.totalorder %s19, 4
      // Predicated region
      $region25: #{tpu_custom_call.1} parent=5 // pred_check
        %p216 = pneg %p215
      $region26: #{tpu_custom_call.1} parent=5 // pred_check_branch
        %218 = sbr.rel (%p216) target = $region28
      $region27: #{tpu_custom_call.1} parent=5 // pred_region
        // Predicated region
        $region29: #{tpu_custom_call.1} parent=27 // pred_check
          %p219 = pneg %p121
        $region30: #{tpu_custom_call.1} parent=27 // pred_check_branch
          %221 = sbr.rel (%p219) target = $region32
        $region31: #{tpu_custom_call.1} parent=27 // pred_region
          %s222 = sand.u32 %s111, 1
          %s223 = scalar_lea.sflag [#allocation10], %s222
          %s224 = sand.u32 %s111, 1
          %s225 = smul.addr %s224, 8
          %s226 = scalar_lea.vmem [#allocation9], %s225
          %s228 = ssub.s32 128, 128
          %229 = vsyncadd %s223, %s228
          %s230 = sadd.s32 %s26, %s27
          %s231 = smul.addr %s230, 128
          %s232 = scalar_lea.hbm %s3, %s231
          %s234 = sshll.u32 %s226, 4
          %s235 = int_to_ptr.vmem [resolvable:$true] %s234
          %237 = dma.hbm_to_vmem [thread:$0]  %s232, 128, %s235, %s223
        $region32: #{tpu_custom_call.1} parent=27 // pred_fallthru
          _
      $region28: #{tpu_custom_call.1} parent=5 // pred_fallthru
        _
      %p238 = scmp.le.s32.totalorder 1, %s19
      %p239 = scmp.lt.s32.totalorder %s19, 5
      %p240 = pnand %p238, %p239
      %p241 = pneg %p240
      // Predicated region
      $region33: #{tpu_custom_call.1} parent=5 // pred_check
        _
      $region34: #{tpu_custom_call.1} parent=5 // pred_check_branch
        %243 = sbr.rel (%p240) target = $region36
      $region35: #{tpu_custom_call.1} parent=5 // pred_region
        %s244 = ssub.s32 %s19, 1
        // Predicated region
        $region37: #{tpu_custom_call.1} parent=35 // pred_check
          %p245 = pneg %p78
        $region38: #{tpu_custom_call.1} parent=35 // pred_check_branch
          %247 = sbr.rel (%p245) target = $region40
        $region39: #{tpu_custom_call.1} parent=35 // pred_region
          %248 = dma.done [#allocation7], 256
        $region40: #{tpu_custom_call.1} parent=35 // pred_fallthru
          _
        %s249 = sand.u32 %s114, 1
        %s250 = scalar_lea.sflag [#allocation10], %s249
        %s251 = sand.u32 %s114, 1
        %s252 = smul.addr %s251, 8
        %s253 = scalar_lea.vmem [#allocation9], %s252
        // Predicated region
        $region41: #{tpu_custom_call.1} parent=35 // pred_check
          %p254 = pneg %p127
        $region42: #{tpu_custom_call.1} parent=35 // pred_check_branch
          %256 = sbr.rel (%p254) target = $region44
        $region43: #{tpu_custom_call.1} parent=35 // pred_region
          %257 = dma.done %s250, 128
        $region44: #{tpu_custom_call.1} parent=35 // pred_fallthru
          _
        %p258 = pneg %p52
        %p259 = pneg %p49
        %p260 = pneg %p78
        %p261 = pneg %p75
        %p262 = pneg %p99
        %p263 = pneg %p96
        %s264 = sand.u32 %s114, 1
        %s265 = scalar_lea.sflag [#allocation10], %s264
        %s266 = sand.u32 %s114, 1
        %s267 = smul.addr %s266, 8
        %s268 = scalar_lea.vmem [#allocation9], %s267
        %p269 = pneg %p127
        %p270 = pneg %p124
        %p271 = pneg %p153
        %p272 = pneg %p150
        %p273 = pneg %p179
        %p274 = pneg %p176
        %p275 = scmp.eq.s32.totalorder %s29, 0
        // Predicated region
        $region45: #{tpu_custom_call.1} parent=35 // pred_check
          %p276 = pneg %p275
        $region46: #{tpu_custom_call.1} parent=35 // pred_check_branch
          %278 = sbr.rel (%p276) target = $region48
        $region47: #{tpu_custom_call.1} parent=35 // pred_region
          %s279 = sld [smem:[#allocation5]]
          %v280 = vstv %s279
          %v281 = vrcp.pop %v280
          %s282 = vtos %v281
          %v283 = vld [vmem:[%s2] sm:$0x1]
          %v284 = vld [vmem:[#allocation6] sm:$0xff]
          %s285 = scalar_lea.vmem [#allocation6], 8
          %v286 = vld [vmem:[%s285] sm:$0xff]
          %v287 = vrot.slane %v284, 4
          %v288 = vadd.f32 %v284, %v287
          %v289 = vrot.slane %v288, 2
          %v290 = vadd.f32 %v288, %v289
          %v291 = vrot.slane %v290, 1
          %v292 = vadd.f32 %v290, %v291
          %v293 = vrot.slane %v286, 4
          %v294 = vadd.f32 %v286, %v293
          %v295 = vrot.slane %v294, 2
          %v296 = vadd.f32 %v294, %v295
          %v297 = vrot.slane %v296, 1
          %v298 = vadd.f32 %v296, %v297
          %v299 = vadd.f32 %v292, %v298
          %300 = vst [vmem:[#allocation12] sm:$0x1] %v299
          %v302 = vlaneseq
          %v303 = vshrl.u32 %v302, 7
          %v304 = vsub.s32 0, %v303
          %v305 = vrot.slane %v283, %v304
          %v307 = vsub.f32 %v284, %v305
          %v308 = vstv %s282
          %v309 = vmul.f32 %v307, %v308
          %310 = vmax.xlane.f32.xlu0 %v309
          %v311 = vpop.xlane.xlu0 %310
          %v312 = vsub.f32 %v309, %v311
          %v313 = vmul.f32 %v312, 1.442695
          %v314 = vpow.pop %v313
          %315 = vadd.xlane.f32.xlu0 %v314
          %v316 = vpop.xlane.xlu0 %315
          %v317 = vrcp.pop %v316
          %v318 = vmul.f32 %v314, %v317
          %319 = vst [vmem:[#allocation2] sm:$0xff] %v318
          %v320 = vsub.f32 %v286, %v305
          %v321 = vmul.f32 %v320, %v308
          %322 = vmax.xlane.f32.xlu0 %v321
          %v323 = vpop.xlane.xlu0 %322
          %v324 = vsub.f32 %v321, %v323
          %v325 = vmul.f32 %v324, 1.442695
          %v326 = vpow.pop %v325
          %327 = vadd.xlane.f32.xlu0 %v326
          %v328 = vpop.xlane.xlu0 %327
          %v329 = vrcp.pop %v328
          %v330 = vmul.f32 %v326, %v329
          %331 = vst [vmem:[#allocation3] sm:$0xff] %v330
          %332 = vst [vmem:[#allocation4] sm:$0x1] 0.0
        $region48: #{tpu_custom_call.1} parent=35 // pred_fallthru
          _
        %v333 = vld [vmem:[%s253] sm:$0xff]
        %v334 = vmul.f32 %v333, 10.0
        %335 = vmax.xlane.f32.xlu0 %v334
        %v336 = vpop.xlane.xlu0 %335
        %v337 = vsub.f32 %v334, %v336
        %v338 = vmul.f32 %v337, 1.442695
        %v339 = vpow.pop %v338
        %340 = vadd.xlane.f32.xlu0 %v339
        %v341 = vpop.xlane.xlu0 %340
        %v342 = vlog2.pop %v341
        %v343 = vmul.f32 %v342, 0.6931472
        %v344 = vadd.f32 %v336, %v343
        %v345 = vsub.f32 %v334, %v344
        %p346 = scmp.ne.s32.totalorder %s29, 0
        %s347 = scalar_select %p346, 1, 0
        %s348 = scvt.s32.f32 %s347
        %p349 = scmp.ne.s32.totalorder %s29, 1
        %s350 = scalar_select %p349, 1, 0
        %s351 = scvt.s32.f32 %s350
        %v352 = vld [vmem:[#allocation2] sm:$0xff]
        %v353 = vstv %s348
        %v354 = vmul.f32 %v353, %v352
        %v355 = vld [vmem:[#allocation3] sm:$0xff]
        %v356 = vstv %s351
        %v357 = vmul.f32 %v356, %v355
        %v358 = vadd.f32 %v354, %v357
        %v359 = vld [vmem:[#allocation4] sm:$0x1]
        %v360 = vmul.f32 %v358, %v345
        %v361 = vrot.slane %v360, 4
        %v362 = vadd.f32 %v360, %v361
        %v363 = vrot.slane %v362, 2
        %v364 = vadd.f32 %v362, %v363
        %v365 = vrot.slane %v364, 1
        %v366 = vadd.f32 %v364, %v365
        %v367 = vadd.f32 %v359, %v366
        %368 = vst [vmem:[#allocation4] sm:$0x1] %v367
        %p369 = scmp.eq.s32.totalorder %s29, 3
        // Predicated region
        $region49: #{tpu_custom_call.1} parent=35 // pred_check
          %p370 = pneg %p369
        $region50: #{tpu_custom_call.1} parent=35 // pred_check_branch
          %372 = sbr.rel (%p370) target = $region52
        $region51: #{tpu_custom_call.1} parent=35 // pred_region
          %v373 = vld [vmem:[#allocation4] sm:$0x1]
          %374 = vst [vmem:[#allocation11] sm:$0x1] %v373
        $region52: #{tpu_custom_call.1} parent=35 // pred_fallthru
          _
        // Predicated region
        $region53: #{tpu_custom_call.1} parent=35 // pred_check
          %p375 = pneg %p150
        $region54: #{tpu_custom_call.1} parent=35 // pred_check_branch
          %377 = sbr.rel (%p375) target = $region56
        $region55: #{tpu_custom_call.1} parent=35 // pred_region
          %s379 = ssub.s32 16, 16
          %380 = vsyncadd [#allocation8], %s379
          %s381 = smul.addr %s28, 16
          %s382 = scalar_lea.hbm %s4, %s381
          %s384 = sshll.u32 [#allocation11], 4
          %s385 = int_to_ptr.vmem [resolvable:$true] %s384
          %387 = dma.vmem_to_hbm [thread:$0]  %s385, 16, %s382, [#allocation8]
        $region56: #{tpu_custom_call.1} parent=35 // pred_fallthru
          _
        // Predicated region
        $region57: #{tpu_custom_call.1} parent=35 // pred_check
          %p388 = pneg %p176
        $region58: #{tpu_custom_call.1} parent=35 // pred_check_branch
          %390 = sbr.rel (%p388) target = $region60
        $region59: #{tpu_custom_call.1} parent=35 // pred_region
          %s392 = ssub.s32 16, 16
          %393 = vsyncadd [#allocation13], %s392
          %s394 = smul.addr %s28, 16
          %s395 = scalar_lea.hbm %s5, %s394
          %s397 = sshll.u32 [#allocation12], 4
          %s398 = int_to_ptr.vmem [resolvable:$true] %s397
          %400 = dma.vmem_to_hbm [thread:$0]  %s398, 16, %s395, [#allocation13]
        $region60: #{tpu_custom_call.1} parent=35 // pred_fallthru
          _
        // Predicated region
        $region61: #{tpu_custom_call.1} parent=35 // pred_check
          %p401 = pneg %p150
        $region62: #{tpu_custom_call.1} parent=35 // pred_check_branch
          %403 = sbr.rel (%p401) target = $region64
        $region63: #{tpu_custom_call.1} parent=35 // pred_region
          %404 = dma.done [#allocation8], 16
        $region64: #{tpu_custom_call.1} parent=35 // pred_fallthru
          _
        // Predicated region
        $region65: #{tpu_custom_call.1} parent=35 // pred_check
          %p405 = pneg %p176
        $region66: #{tpu_custom_call.1} parent=35 // pred_check_branch
          %407 = sbr.rel (%p405) target = $region68
        $region67: #{tpu_custom_call.1} parent=35 // pred_region
          %408 = dma.done [#allocation13], 16
        $region68: #{tpu_custom_call.1} parent=35 // pred_fallthru
          _
      $region36: #{tpu_custom_call.1} parent=5 // pred_fallthru
        _
      %p409 = scmp.le.s32.totalorder 2, %s19
      // Predicated region
      $region69: #{tpu_custom_call.1} parent=5 // pred_check
        %p410 = pneg %p409
      $region70: #{tpu_custom_call.1} parent=5 // pred_check_branch
        %412 = sbr.rel (%p410) target = $region72
      $region71: #{tpu_custom_call.1} parent=5 // pred_region
        %s413 = ssub.s32 %s19, 2
      $region72: #{tpu_custom_call.1} parent=5 // pred_fallthru
        _
    $region6: #{tpu_custom_call.1} parent=1 // loop_footer
      %s23 = sadd.s32 1, %s19
    $region7: #{tpu_custom_call.1} parent=1 // loop_footer_branch
      %18 = sbr.rel target = $region3
    $region8: #{tpu_custom_call.1} parent=1 // loop_exit
      _
    %414 = vsyncpa [#allocation7], 1
    %s415 = scalar_lea.sflag [#allocation7], 1
    %416 = vsyncpa %s415, 1
    %417 = vsyncpa [#allocation10], 1
    %s418 = scalar_lea.sflag [#allocation10], 1
    %419 = vsyncpa %s418, 1
    %420 = vsyncpa [#allocation8], 1
    %s421 = scalar_lea.sflag [#allocation8], 1
    %422 = vsyncpa %s421, 1
    %423 = vsyncpa [#allocation13], 1

</llo_original>
